<compile_context>
chip_gen: v7x
topology: tpu7x:2x2x1
jax: 0.10.0
libtpu: 0.0.40
codegen_flags: <defaults>
</compile_context>

<pallas_src>
import jax
import jax.numpy as jnp
from jax.experimental import pallas as pl
from jax.experimental.pallas import tpu as pltpu


_LANE = 128
_SUBLANE = 8


def _cdiv(a, b):
    return -(-a // b)


def _round_up(x, m):
    return ((x + m - 1) // m) * m


def _make_kernel(rem, out_is_f32):
    """Build the kernel body. `rem` = n % tn (static); masks the tail chunk."""

    def _chunk_sum(data_ref):
        # streaming masked sum of the tn slices of this reduction chunk
        tn = data_ref.shape[0]
        if rem:
            not_last = pl.program_id(1) < pl.num_programs(1) - 1
            tail_scale = jnp.where(not_last, 1.0, 0.0).astype(jnp.float32)
        acc = None
        for i in range(tn):
            x = data_ref[i].astype(jnp.float32)
            if rem and i >= rem:
                x = x * tail_scale  # zero out-of-range slices of the tail chunk
            acc = x if acc is None else acc + x
        return acc

    if out_is_f32:
        # accumulate directly into the resident f32 output block
        def kernel(data_ref, res_ref, out_ref):
            @pl.when(pl.program_id(1) == 0)
            def _():
                out_ref[...] = res_ref[...]

            out_ref[...] += _chunk_sum(data_ref)
    else:
        # narrow output dtype: accumulate in an f32 scratch, cast at the end
        def kernel(data_ref, res_ref, out_ref, acc_ref):
            @pl.when(pl.program_id(1) == 0)
            def _():
                acc_ref[...] = res_ref[...].astype(jnp.float32)

            acc_ref[...] += _chunk_sum(data_ref)

            @pl.when(pl.program_id(1) == pl.num_programs(1) - 1)
            def _():
                out_ref[...] = acc_ref[...].astype(out_ref.dtype)

    return kernel


def residual_forward(data, residual):
    """Pallas implementation of Residual.forward(data, residual)."""
    if isinstance(data, (list, tuple)):
        data = jnp.stack(data)

    n = data.shape[0]
    assert data.shape[1:] == residual.shape, (
        "each element of `data` must match `residual` exactly")
    out_dtype = jnp.result_type(data.dtype, residual.dtype)
    out_shape = residual.shape

    if n == 0 or residual.size == 0:
        return residual.astype(out_dtype)

    S = int(residual.size)

    # ---- lane-dense 2-D view: (rows, 128) ----
    rows = _cdiv(S, _LANE)
    s_pad = rows * _LANE

    # keep data in its native dtype (no extra HBM pass); residual is small
    data_flat = data.reshape(n, S)
    res_flat = residual.reshape(S).astype(out_dtype)
    if s_pad != S:  # only pad when the lane-dense view actually needs it
        data_flat = jnp.pad(data_flat, ((0, 0), (0, s_pad - S)))
        res_flat = jnp.pad(res_flat, (0, s_pad - S))

    data2 = data_flat.reshape(n, rows, _LANE)
    res2 = res_flat.reshape(rows, _LANE)

    # ---- spatial tile: multiple of the data dtype's sublane packing,
    #      capped at 1024 rows (~8 MiB/step f32), and at ceil(rows/2) so the
    #      parallel axis has >= 2 blocks (v7x megacore) ----
    itemsize = jnp.dtype(data.dtype).itemsize
    sub = {4: _SUBLANE, 2: 16, 1: 32}.get(itemsize, _SUBLANE)
    if rows <= sub:
        r_t = rows  # full second-to-last dim (allowed even if not mult of 8)
    else:
        r_t = min(1024, _round_up(_cdiv(rows, 2), sub))
    grid_r = _cdiv(rows, r_t)

    # ---- reduction chunk: up to 16 slices per grid step, tail masked ----
    tn = min(16, n)
    grid_k = _cdiv(n, tn)
    rem = n % tn

    out_is_f32 = out_dtype == jnp.float32
    kernel = _make_kernel(rem, out_is_f32)
    scratch = [] if out_is_f32 else [pltpu.VMEM((r_t, _LANE), jnp.float32)]

    out2 = pl.pallas_call(
        kernel,
        out_shape=jax.ShapeDtypeStruct((rows, _LANE), out_dtype),
        grid_spec=pltpu.PrefetchScalarGridSpec(
            num_scalar_prefetch=0,
            grid=(grid_r, grid_k),
            in_specs=[
                # tn slices of data per reduction step, spatial tile r
                pl.BlockSpec((tn, r_t, _LANE), lambda r, k: (k, r, 0)),
                # residual tile: constant over the reduction axis
                pl.BlockSpec((r_t, _LANE), lambda r, k: (r, 0)),
            ],
            out_specs=pl.BlockSpec((r_t, _LANE), lambda r, k: (r, 0)),
            scratch_shapes=scratch,
        ),
        compiler_params=pltpu.CompilerParams(
            dimension_semantics=("parallel", "arbitrary"),
            vmem_limit_bytes=48 * 1024 * 1024,
        ),
        # residual (operand 1) aliases output 0: no extra HBM allocation
        input_output_aliases={1: 0},
    )(data2, res2)

    if s_pad != S:
        return out2.reshape(s_pad)[:S].reshape(out_shape)
    return out2.reshape(out_shape)


if __name__ == "__main__":
    key = jax.random.PRNGKey(0)
    k1, k2 = jax.random.split(key)

    # data: stack of 8 tensors, each shaped like residual (C=4, H=16, W=16)
    data = jax.random.normal(k1, (8, 4, 16, 16), dtype=jnp.float32)
    residual = jax.random.normal(k2, (4, 16, 16), dtype=jnp.float32)

    out = residual_forward(data, residual)
    jax.block_until_ready(out)

    # reference: residual + sum over leading axis
    ref = residual + jnp.sum(data, axis=0)
    assert out.shape == ref.shape and out.dtype == ref.dtype
    assert jnp.allclose(out, ref, atol=1e-5, rtol=1e-5)

    print("KERNEL_OK")
</pallas_src>

<mosaic_0001>
module attributes {stable_mosaic.version = 11 : i64} {
  func.func @kernel(%arg0: i32, %arg1: i32, %arg2: memref<8x8x128xf32, #tpu.memory_space<vmem>>, %arg3: memref<8x128xf32, #tpu.memory_space<vmem>>, %arg4: memref<8x128xf32, #tpu.memory_space<vmem>>) attributes {dimension_semantics = [#tpu.dimension_semantics<parallel>, #tpu.dimension_semantics<arbitrary>], iteration_bounds = array<i64: 1, 1>, scalar_prefetch = 0 : i64, scratch_operands = 0 : i64, tpu.core_type = #tpu.core_type<tc>, window_params = [{transform_indices = @transform_0, window_bounds = array<i64: 8, 8, 128>}, {transform_indices = @transform_1, window_bounds = array<i64: 8, 128>}, {transform_indices = @transform_2, window_bounds = array<i64: 8, 128>}]} {
    %c0_i32 = arith.constant 0 : i32
    %0 = arith.cmpi eq, %arg1, %c0_i32 : i32
    %1 = arith.extui %0 : i1 to i32
    %c0_i32_0 = arith.constant 0 : i32
    %2 = arith.cmpi ne, %1, %c0_i32_0 : i32
    scf.if %2 {
      %c0_21 = arith.constant 0 : index
      %c0_22 = arith.constant 0 : index
      %29 = vector.load %arg3[%c0_21, %c0_22] : memref<8x128xf32, #tpu.memory_space<vmem>>, vector<8x128xf32>
      %c0_23 = arith.constant 0 : index
      %c0_24 = arith.constant 0 : index
      %30 = vector.load %arg4[%c0_23, %c0_24] : memref<8x128xf32, #tpu.memory_space<vmem>>, vector<8x128xf32>
      tpu.vector_store %arg4[%c0_23, %c0_24], %29 {strides = array<i32>} : memref<8x128xf32, #tpu.memory_space<vmem>>, vector<8x128xf32>,
    } else {
    }
    %c0 = arith.constant 0 : index
    %c0_1 = arith.constant 0 : index
    %3 = vector.load %arg4[%c0, %c0_1] : memref<8x128xf32, #tpu.memory_space<vmem>>, vector<8x128xf32>
    %c0_2 = arith.constant 0 : index
    %c0_3 = arith.constant 0 : index
    %c0_4 = arith.constant 0 : index
    %4 = vector.load %arg2[%c0_2, %c0_3, %c0_4] : memref<8x8x128xf32, #tpu.memory_space<vmem>>, vector<1x8x128xf32>
    %5 = vector.shape_cast %4 : vector<1x8x128xf32> to vector<8x128xf32>
    %c1 = arith.constant 1 : index
    %c0_5 = arith.constant 0 : index
    %c0_6 = arith.constant 0 : index
    %6 = vector.load %arg2[%c1, %c0_5, %c0_6] : memref<8x8x128xf32, #tpu.memory_space<vmem>>, vector<1x8x128xf32>
    %7 = vector.shape_cast %6 : vector<1x8x128xf32> to vector<8x128xf32>
    %8 = arith.addf %5, %7 : vector<8x128xf32>
    %c2 = arith.constant 2 : index
    %c0_7 = arith.constant 0 : index
    %c0_8 = arith.constant 0 : index
    %9 = vector.load %arg2[%c2, %c0_7, %c0_8] : memref<8x8x128xf32, #tpu.memory_space<vmem>>, vector<1x8x128xf32>
    %10 = vector.shape_cast %9 : vector<1x8x128xf32> to vector<8x128xf32>
    %11 = arith.addf %8, %10 : vector<8x128xf32>
    %c3 = arith.constant 3 : index
    %c0_9 = arith.constant 0 : index
    %c0_10 = arith.constant 0 : index
    %12 = vector.load %arg2[%c3, %c0_9, %c0_10] : memref<8x8x128xf32, #tpu.memory_space<vmem>>, vector<1x8x128xf32>
    %13 = vector.shape_cast %12 : vector<1x8x128xf32> to vector<8x128xf32>
    %14 = arith.addf %11, %13 : vector<8x128xf32>
    %c4 = arith.constant 4 : index
    %c0_11 = arith.constant 0 : index
    %c0_12 = arith.constant 0 : index
    %15 = vector.load %arg2[%c4, %c0_11, %c0_12] : memref<8x8x128xf32, #tpu.memory_space<vmem>>, vector<1x8x128xf32>
    %16 = vector.shape_cast %15 : vector<1x8x128xf32> to vector<8x128xf32>
    %17 = arith.addf %14, %16 : vector<8x128xf32>
    %c5 = arith.constant 5 : index
    %c0_13 = arith.constant 0 : index
    %c0_14 = arith.constant 0 : index
    %18 = vector.load %arg2[%c5, %c0_13, %c0_14] : memref<8x8x128xf32, #tpu.memory_space<vmem>>, vector<1x8x128xf32>
    %19 = vector.shape_cast %18 : vector<1x8x128xf32> to vector<8x128xf32>
    %20 = arith.addf %17, %19 : vector<8x128xf32>
    %c6 = arith.constant 6 : index
    %c0_15 = arith.constant 0 : index
    %c0_16 = arith.constant 0 : index
    %21 = vector.load %arg2[%c6, %c0_15, %c0_16] : memref<8x8x128xf32, #tpu.memory_space<vmem>>, vector<1x8x128xf32>
    %22 = vector.shape_cast %21 : vector<1x8x128xf32> to vector<8x128xf32>
    %23 = arith.addf %20, %22 : vector<8x128xf32>
    %c7 = arith.constant 7 : index
    %c0_17 = arith.constant 0 : index
    %c0_18 = arith.constant 0 : index
    %24 = vector.load %arg2[%c7, %c0_17, %c0_18] : memref<8x8x128xf32, #tpu.memory_space<vmem>>, vector<1x8x128xf32>
    %25 = vector.shape_cast %24 : vector<1x8x128xf32> to vector<8x128xf32>
    %26 = arith.addf %23, %25 : vector<8x128xf32>
    %27 = arith.addf %3, %26 : vector<8x128xf32>
    %c0_19 = arith.constant 0 : index
    %c0_20 = arith.constant 0 : index
    %28 = vector.load %arg4[%c0_19, %c0_20] : memref<8x128xf32, #tpu.memory_space<vmem>>, vector<8x128xf32>
    tpu.vector_store %arg4[%c0_19, %c0_20], %27 {strides = array<i32>} : memref<8x128xf32, #tpu.memory_space<vmem>>, vector<8x128xf32>,
    return
  }
  func.func @transform_0(%arg0: i32, %arg1: i32) -> (i32, i32, i32) {
    %c0_i32 = arith.constant 0 : i32
    %c0_i32_0 = arith.constant 0 : i32
    return %arg1, %arg0, %c0_i32 : i32, i32, i32
  }
  func.func @transform_1(%arg0: i32, %arg1: i32) -> (i32, i32) {
    %c0_i32 = arith.constant 0 : i32
    %c0_i32_0 = arith.constant 0 : i32
    return %arg0, %c0_i32 : i32, i32
  }
  func.func @transform_2(%arg0: i32, %arg1: i32) -> (i32, i32) {
    %c0_i32 = arith.constant 0 : i32
    %c0_i32_0 = arith.constant 0 : i32
    return %arg0, %c0_i32 : i32, i32
  }
}

</mosaic_0001>

<llo_original>
// kernel: tpu_custom_call.1
$region0: #{tpu_custom_call.1}
  #allocation0 [shape = 'u32[]', space=smem, size = 0x4, offset = 0x4, fixed_abs, tag = 'smem constant byte address 0x4 - core index']
  #allocation1 [shape = 'u32[144,128]{1,0:T(1,128)}', space=vmem, size = 0x12000, scoped, tag = 'internal scratch']
  %s0 = inlined_call_operand.hbm [shape: f32[8,8,128], index: 0, kind: input, shape index: {}]
  %s1 = inlined_call_operand.hbm [shape: f32[8,128], index: 1, kind: input, shape index: {}, may-alias: {1,2}]
  %s2 = inlined_call_operand.hbm [shape: f32[8,128], index: 2, kind: output, shape index: {}, may-alias: {1,2}]
  %s3 = sld [smem:[#allocation0]]
  $region30: #{tpu_custom_call.1} parent=0
    _
  %s5 = ssub.s32 1, %s3
  %s6 = scalar_select 0, %s5, %s3
  $region1: #{tpu_custom_call.1} parent=0
    #allocation2 [shape = 'u8[32768]{0}', space=vmem, size = 0x8000, scoped, tag = 'input window, operand 0, single buffered']
    #allocation3 [shape = 's32[1]{0}', space=sflag, size = 0x4, scoped, tag = 'scoped memory for tpu_custom_call.1']
    #allocation4 [shape = 's32[1]{0}', space=sflag, size = 0x4, scoped, tag = 'scoped memory for tpu_custom_call.1']
    #allocation5 [shape = 'u8[4096]{0}', space=vmem, size = 0x1000, scoped, tag = 'input window, operand 1, single buffered']
    #allocation6 [shape = 's32[1]{0}', space=sflag, size = 0x4, scoped, tag = 'scoped memory for tpu_custom_call.1']
    #allocation7 [shape = 'u8[4096]{0}', space=vmem, size = 0x1000, scoped, tag = 'output window, operand 0, single buffered']
    %7 = vsyncpa [#allocation3], 0
    %8 = vsyncpa [#allocation6], 0
    %9 = vsyncpa [#allocation4], 0
    // Predicated region
    $region2: #{tpu_custom_call.1} parent=1 // pred_check
      _
    $region3: #{tpu_custom_call.1} parent=1 // pred_check_branch
      %11 = sbr.rel (0) target = $region5
    $region4: #{tpu_custom_call.1} parent=1 // pred_region
      %s13 = ssub.s32 1024, 1024
      %14 = vsyncadd [#allocation3], %s13
      %s15 = sshll.u32 [#allocation2], 4
      %s16 = int_to_ptr.vmem [resolvable:$true] %s15
      %21 = dma.hbm_to_vmem [thread:$0]  %s0, 1024, %s16, [#allocation3], 128, 128, 8
    $region5: #{tpu_custom_call.1} parent=1 // pred_fallthru
      _
    // Predicated region
    $region6: #{tpu_custom_call.1} parent=1 // pred_check
      _
    $region7: #{tpu_custom_call.1} parent=1 // pred_check_branch
      %23 = sbr.rel (0) target = $region9
    $region8: #{tpu_custom_call.1} parent=1 // pred_region
      %s25 = ssub.s32 128, 128
      %26 = vsyncadd [#allocation6], %s25
      %s28 = sshll.u32 [#allocation5], 4
      %s29 = int_to_ptr.vmem [resolvable:$true] %s28
      %31 = dma.hbm_to_vmem [thread:$0]  %s1, 128, %s29, [#allocation6]
    $region9: #{tpu_custom_call.1} parent=1 // pred_fallthru
      _
    // Predicated region
    $region10: #{tpu_custom_call.1} parent=1 // pred_check
      _
    $region11: #{tpu_custom_call.1} parent=1 // pred_check_branch
      %33 = sbr.rel (0) target = $region13
    $region12: #{tpu_custom_call.1} parent=1 // pred_region
      %34 = dma.done [#allocation3], 1024
    $region13: #{tpu_custom_call.1} parent=1 // pred_fallthru
      _
    // Predicated region
    $region14: #{tpu_custom_call.1} parent=1 // pred_check
      _
    $region15: #{tpu_custom_call.1} parent=1 // pred_check_branch
      %36 = sbr.rel (0) target = $region17
    $region16: #{tpu_custom_call.1} parent=1 // pred_region
      %37 = dma.done [#allocation6], 128
    $region17: #{tpu_custom_call.1} parent=1 // pred_fallthru
      _
    %p38 = scmp.eq.s32.totalorder 0, 0
    // Predicated region
    $region18: #{tpu_custom_call.1} parent=1 // pred_check
      %p39 = pneg %p38
    $region19: #{tpu_custom_call.1} parent=1 // pred_check_branch
      %41 = sbr.rel (%p39) target = $region21
    $region20: #{tpu_custom_call.1} parent=1 // pred_region
      %v42 = vld [vmem:[#allocation5] sm:$0xff]
      %43 = vst [vmem:[#allocation7] sm:$0xff] %v42
    $region21: #{tpu_custom_call.1} parent=1 // pred_fallthru
      _
    %v44 = vld [vmem:[#allocation7] sm:$0xff]
    %v45 = vld [vmem:[#allocation2] sm:$0xff]
    %s46 = scalar_lea.vmem [#allocation2], 8
    %v47 = vld [vmem:[%s46] sm:$0xff]
    %v48 = vadd.f32 %v45, %v47
    %s49 = scalar_lea.vmem [#allocation2], 16
    %v50 = vld [vmem:[%s49] sm:$0xff]
    %v51 = vadd.f32 %v48, %v50
    %s52 = scalar_lea.vmem [#allocation2], 24
    %v53 = vld [vmem:[%s52] sm:$0xff]
    %v54 = vadd.f32 %v51, %v53
    %s55 = scalar_lea.vmem [#allocation2], 32
    %v56 = vld [vmem:[%s55] sm:$0xff]
    %v57 = vadd.f32 %v54, %v56
    %s58 = scalar_lea.vmem [#allocation2], 40
    %v59 = vld [vmem:[%s58] sm:$0xff]
    %v60 = vadd.f32 %v57, %v59
    %s61 = scalar_lea.vmem [#allocation2], 48
    %v62 = vld [vmem:[%s61] sm:$0xff]
    %v63 = vadd.f32 %v60, %v62
    %s64 = scalar_lea.vmem [#allocation2], 56
    %v65 = vld [vmem:[%s64] sm:$0xff]
    %v66 = vadd.f32 %v63, %v65
    %v67 = vadd.f32 %v44, %v66
    %68 = vst [vmem:[#allocation7] sm:$0xff] %v67
    // Predicated region
    $region22: #{tpu_custom_call.1} parent=1 // pred_check
      _
    $region23: #{tpu_custom_call.1} parent=1 // pred_check_branch
      %70 = sbr.rel (0) target = $region25
    $region24: #{tpu_custom_call.1} parent=1 // pred_region
      %s72 = ssub.s32 128, 128
      %73 = vsyncadd [#allocation4], %s72
      %s75 = sshll.u32 [#allocation7], 4
      %s76 = int_to_ptr.vmem [resolvable:$true] %s75
      %78 = dma.vmem_to_hbm [thread:$0]  %s76, 128, %s2, [#allocation4]
    $region25: #{tpu_custom_call.1} parent=1 // pred_fallthru
      _
    // Predicated region
    $region26: #{tpu_custom_call.1} parent=1 // pred_check
      _
    $region27: #{tpu_custom_call.1} parent=1 // pred_check_branch
      %80 = sbr.rel (0) target = $region29
    $region28: #{tpu_custom_call.1} parent=1 // pred_region
      %81 = dma.done [#allocation4], 128
    $region29: #{tpu_custom_call.1} parent=1 // pred_fallthru
      _
    %82 = vsyncpa [#allocation3], 1
    %83 = vsyncpa [#allocation6], 1
    %84 = vsyncpa [#allocation4], 1

</llo_original>
